<compile_context>
chip_gen: v7x
topology: tpu7x:2x2x1
jax: 0.10.0
libtpu: 0.0.40
codegen_flags: <defaults>
</compile_context>

<pallas_src>
import jax
import jax.numpy as jnp
from jax.experimental import pallas as pl
from jax.experimental.pallas import tpu as pltpu


def _round_up(x, m):
    return ((x + m - 1) // m) * m


def _make_stats_kernel(mb, cp, chunk):
    """Phase A: conv-block matmul + per-block BN partial sums (conv not stored)."""

    def kernel(p_ref, w_ref, ssum_ref, ssq_ref):
        conv = jnp.dot(p_ref[...], w_ref[...],
                       preferred_element_type=jnp.float32)        # (mb, cp) f32
        # Accumulate sum / sum-of-squares over row chunks so the conv*conv
        # temporary never needs the whole block live in vregs at once.
        ssum = jnp.zeros((1, cp), jnp.float32)
        ssq = jnp.zeros((1, cp), jnp.float32)
        for c in range(mb // chunk):
            blk = conv[c * chunk:(c + 1) * chunk, :]
            ssum = ssum + jnp.sum(blk, axis=0, keepdims=True)
            ssq = ssq + jnp.sum(blk * blk, axis=0, keepdims=True)
        ssum_ref[...] = ssum
        ssq_ref[...] = ssq

    return kernel


def _bn_relu_kernel(p_ref, w_ref, scale_ref, shift_ref, o_ref):
    """Phase B: recompute the conv block, apply folded BN scale/shift + ReLU."""
    conv = jnp.dot(p_ref[...], w_ref[...], preferred_element_type=jnp.float32)
    y = conv * scale_ref[...] + shift_ref[...]
    o_ref[...] = jnp.maximum(y, 0.0).astype(o_ref.dtype)


def conv_bn_relu(x_nchw, weight_oihw, gamma, beta, *, stride, padding,
                 eps=1e-5, compute_dtype=jnp.bfloat16, block_rows=256):
    """Conv2d(bias=False) + BatchNorm2d(training) + ReLU.  NCHW in / NCHW out."""
    N, Cin, H, W = x_nchw.shape
    Cout, Cin_w, KH, KW = weight_oihw.shape
    assert Cin == Cin_w
    assert block_rows % 8 == 0
    Hout = (H + 2 * padding - KH) // stride + 1
    Wout = (W + 2 * padding - KW) // stride + 1
    HWo = Hout * Wout
    M = N * HWo                                   # true BN count (N*Hout*Wout)
    K = KH * KW * Cin
    Kp = _round_up(K, 128)                        # lane-dense contraction dim
    Cp = _round_up(Cout, 128)                     # lane-dense channel dim
    Mp = _round_up(M, block_rows)
    G = Mp // block_rows
    MB = block_rows
    chunk = 64 if MB % 64 == 0 else 8
    out_dtype = x_nchw.dtype

    # ---- wrapper glue (plain JAX): layout, halo, lane-dense im2col patch ----
    # TODO(synk): if the surrounding model keeps activations in NHWC, drop the
    # NCHW<->NHWC transposes; for large Cin, keep taps in-kernel instead of
    # materializing the KH*KW-times-larger patch.
    x_nhwc = jnp.transpose(x_nchw, (0, 2, 3, 1)).astype(compute_dtype)
    x_padded = jnp.pad(
        x_nhwc, ((0, 0), (padding, padding), (padding, padding), (0, 0)))
    taps = []
    for kh in range(KH):
        for kw in range(KW):
            taps.append(x_padded[:, kh:kh + (Hout - 1) * stride + 1:stride,
                                 kw:kw + (Wout - 1) * stride + 1:stride, :])
    patch = jnp.concatenate(taps, axis=-1).reshape(M, K)      # (M, KH*KW*Cin)
    patch = jnp.pad(patch, ((0, Mp - M), (0, Kp - K)))         # zero rows/cols

    w_kc = jnp.transpose(weight_oihw, (2, 3, 1, 0)).reshape(K, Cout)
    w_kc = jnp.pad(w_kc.astype(compute_dtype), ((0, Kp - K), (0, Cp - Cout)))

    gamma_p = jnp.pad(gamma.astype(jnp.float32), (0, Cp - Cout))
    beta_p = jnp.pad(beta.astype(jnp.float32), (0, Cp - Cout))

    # Scoped-VMEM raise: usage here is tiny, but production-size row blocks
    # (>=512 rows) want headroom above the 16/32 MiB scoped defaults on
    # v5e/v6e; 48 MiB stays below v7x's 64 MiB physical VMEM.
    params = pltpu.CompilerParams(
        dimension_semantics=("parallel",),
        vmem_limit_bytes=48 * 1024 * 1024)

    # ---- Phase A: per-block BN partial sums (conv slab never hits HBM) -----
    ssum, ssq = pl.pallas_call(
        _make_stats_kernel(MB, Cp, chunk),
        grid=(G,),
        in_specs=[pl.BlockSpec((MB, Kp), lambda i: (i, 0)),
                  pl.BlockSpec((Kp, Cp), lambda i: (0, 0))],
        out_specs=[pl.BlockSpec((None, 1, Cp), lambda i: (i, 0, 0)),
                   pl.BlockSpec((None, 1, Cp), lambda i: (i, 0, 0))],
        out_shape=[jax.ShapeDtypeStruct((G, 1, Cp), jnp.float32),
                   jax.ShapeDtypeStruct((G, 1, Cp), jnp.float32)],
        compiler_params=params,
    )(patch, w_kc)

    # ---- Fold batch statistics ONCE (hoisted out of the grid loop) ---------
    # Biased batch stats over (N, Hout, Wout).  Zero-padded rows and zero
    # weight columns contribute nothing to the sums, so the true count M is
    # the correct divisor.  Padded channels end up with scale = shift = 0.
    # TODO(synk): running_mean / running_var buffer updates are module state,
    # not forward outputs, and are not reproduced here.
    inv_count = 1.0 / float(M)
    mean = jnp.sum(ssum[:, 0, :], axis=0) * inv_count                  # (Cp,)
    var = jnp.maximum(jnp.sum(ssq[:, 0, :], axis=0) * inv_count
                      - mean * mean, 0.0)
    inv_std = jax.lax.rsqrt(var + eps)
    scale = (gamma_p * inv_std).reshape(1, Cp)
    shift = (beta_p - mean * gamma_p * inv_std).reshape(1, Cp)

    # ---- Phase B: recompute conv block, apply scale/shift + ReLU -----------
    out_flat = pl.pallas_call(
        _bn_relu_kernel,
        grid=(G,),
        in_specs=[pl.BlockSpec((MB, Kp), lambda i: (i, 0)),
                  pl.BlockSpec((Kp, Cp), lambda i: (0, 0)),
                  pl.BlockSpec((1, Cp), lambda i: (0, 0)),
                  pl.BlockSpec((1, Cp), lambda i: (0, 0))],
        out_specs=pl.BlockSpec((MB, Cp), lambda i: (i, 0)),
        out_shape=jax.ShapeDtypeStruct((Mp, Cp), out_dtype),
        compiler_params=params,
    )(patch, w_kc, scale, shift)

    out = out_flat[:M, :Cout].reshape(N, Hout, Wout, Cout)
    return jnp.transpose(out, (0, 3, 1, 2))       # back to NCHW


def _reference(x_nchw, weight_oihw, gamma, beta, *, stride, padding, eps=1e-5):
    conv = jax.lax.conv_general_dilated(
        x_nchw, weight_oihw,
        window_strides=(stride, stride),
        padding=((padding, padding), (padding, padding)),
        dimension_numbers=("NCHW", "OIHW", "NCHW"))
    mean = jnp.mean(conv, axis=(0, 2, 3), keepdims=True)
    var = jnp.mean((conv - mean) ** 2, axis=(0, 2, 3), keepdims=True)
    y = (conv - mean) / jnp.sqrt(var + eps)
    y = y * gamma.reshape(1, -1, 1, 1) + beta.reshape(1, -1, 1, 1)
    return jnp.maximum(y, 0.0)


if __name__ == "__main__":
    # ConvBnReluLayer(inplanes=4, planes=8, kernel_size=3, padding=1, stride=1)
    N, Cin, H, W = 2, 4, 16, 16
    Cout, KH, KW = 8, 3, 3
    stride, padding = 1, 1

    key = jax.random.PRNGKey(0)
    kx, kw_, kg, kb = jax.random.split(key, 4)
    x = jax.random.normal(kx, (N, Cin, H, W), dtype=jnp.float32)
    weight = jax.random.normal(kw_, (Cout, Cin, KH, KW), dtype=jnp.float32) * 0.1
    gamma = 1.0 + 0.1 * jax.random.normal(kg, (Cout,), dtype=jnp.float32)
    beta = 0.1 * jax.random.normal(kb, (Cout,), dtype=jnp.float32)

    ref = _reference(x, weight, gamma, beta, stride=stride, padding=padding)

    # f32 compute path: strict check against the XLA reference.
    out_f32 = jax.block_until_ready(
        conv_bn_relu(x, weight, gamma, beta, stride=stride, padding=padding,
                     compute_dtype=jnp.float32))
    # Default bf16 compute path (halved patch/weight HBM reads, native-rate
    # MXU); accumulation and BN math stay f32, so only input rounding remains.
    out_bf16 = jax.block_until_ready(
        conv_bn_relu(x, weight, gamma, beta, stride=stride, padding=padding))

    assert out_f32.shape == ref.shape == (N, Cout, H // stride, W // stride)
    assert out_bf16.shape == ref.shape
    err_f32 = float(jnp.max(jnp.abs(out_f32 - ref)))
    err_bf16 = float(jnp.max(jnp.abs(out_bf16 - ref)))
    assert jnp.allclose(out_f32, ref, rtol=1e-4, atol=1e-4), err_f32
    assert jnp.allclose(out_bf16, ref, rtol=5e-2, atol=5e-2), err_bf16

    print("KERNEL_OK")
</pallas_src>

<mosaic_0001>
module attributes {stable_mosaic.version = 11 : i64} {
  func.func @kernel(%arg0: i32, %arg1: memref<256x128xf32, #tpu.memory_space<vmem>>, %arg2: memref<128x128xf32, #tpu.memory_space<vmem>>, %arg3: memref<1x1x128xf32, #tpu.memory_space<vmem>>, %arg4: memref<1x1x128xf32, #tpu.memory_space<vmem>>) attributes {dimension_semantics = [#tpu.dimension_semantics<parallel>], iteration_bounds = array<i64: 2>, scalar_prefetch = 0 : i64, scratch_operands = 0 : i64, tpu.core_type = #tpu.core_type<tc>, window_params = [{transform_indices = @transform_0, window_bounds = array<i64: 256, 128>}, {pipeline_mode = #tpu.pipeline_mode<synchronous>, transform_indices = @transform_1, window_bounds = array<i64: 128, 128>}, {transform_indices = @transform_2, window_bounds = array<i64: 1, 1, 128>}, {transform_indices = @transform_3, window_bounds = array<i64: 1, 1, 128>}]} {
    %c0 = arith.constant 0 : index
    %c0_0 = arith.constant 0 : index
    %0 = vector.load %arg1[%c0, %c0_0] : memref<256x128xf32, #tpu.memory_space<vmem>>, vector<256x128xf32>
    %c0_1 = arith.constant 0 : index
    %c0_2 = arith.constant 0 : index
    %1 = vector.load %arg2[%c0_1, %c0_2] : memref<128x128xf32, #tpu.memory_space<vmem>>, vector<128x128xf32>
    %cst = arith.constant dense<0.000000e+00> : vector<256x128xf32>
    %2 = tpu.matmul %0, %1, %cst {dimension_numbers = #tpu.dot_dimension_numbers<[1], [0], [0], [1], [0, 0, 1, 1], [], []>} : vector<256x128xf32>, vector<128x128xf32>, vector<256x128xf32> -> vector<256x128xf32>
    %cst_3 = arith.constant 0.000000e+00 : f32
    %3 = vector.broadcast %cst_3 : f32 to vector<1x128xf32>
    %cst_4 = arith.constant 0.000000e+00 : f32
    %4 = vector.broadcast %cst_4 : f32 to vector<1x128xf32>
    %5 = vector.extract_strided_slice %2 {offsets = [0, 0], sizes = [64, 128], strides = [1, 1]} : vector<256x128xf32> to vector<64x128xf32>
    %cst_5 = arith.constant dense<0.000000e+00> : vector<128xf32>
    %6 = vector.multi_reduction <add>, %5, %cst_5 [0] : vector<64x128xf32> to vector<128xf32>
    %7 = vector.shape_cast %6 : vector<128xf32> to vector<1x128xf32>
    %8 = arith.addf %3, %7 : vector<1x128xf32>
    %9 = arith.mulf %5, %5 : vector<64x128xf32>
    %cst_6 = arith.constant dense<0.000000e+00> : vector<128xf32>
    %10 = vector.multi_reduction <add>, %9, %cst_6 [0] : vector<64x128xf32> to vector<128xf32>
    %11 = vector.shape_cast %10 : vector<128xf32> to vector<1x128xf32>
    %12 = arith.addf %4, %11 : vector<1x128xf32>
    %13 = vector.extract_strided_slice %2 {offsets = [64, 0], sizes = [64, 128], strides = [1, 1]} : vector<256x128xf32> to vector<64x128xf32>
    %cst_7 = arith.constant dense<0.000000e+00> : vector<128xf32>
    %14 = vector.multi_reduction <add>, %13, %cst_7 [0] : vector<64x128xf32> to vector<128xf32>
    %15 = vector.shape_cast %14 : vector<128xf32> to vector<1x128xf32>
    %16 = arith.addf %8, %15 : vector<1x128xf32>
    %17 = arith.mulf %13, %13 : vector<64x128xf32>
    %cst_8 = arith.constant dense<0.000000e+00> : vector<128xf32>
    %18 = vector.multi_reduction <add>, %17, %cst_8 [0] : vector<64x128xf32> to vector<128xf32>
    %19 = vector.shape_cast %18 : vector<128xf32> to vector<1x128xf32>
    %20 = arith.addf %12, %19 : vector<1x128xf32>
    %21 = vector.extract_strided_slice %2 {offsets = [128, 0], sizes = [64, 128], strides = [1, 1]} : vector<256x128xf32> to vector<64x128xf32>
    %cst_9 = arith.constant dense<0.000000e+00> : vector<128xf32>
    %22 = vector.multi_reduction <add>, %21, %cst_9 [0] : vector<64x128xf32> to vector<128xf32>
    %23 = vector.shape_cast %22 : vector<128xf32> to vector<1x128xf32>
    %24 = arith.addf %16, %23 : vector<1x128xf32>
    %25 = arith.mulf %21, %21 : vector<64x128xf32>
    %cst_10 = arith.constant dense<0.000000e+00> : vector<128xf32>
    %26 = vector.multi_reduction <add>, %25, %cst_10 [0] : vector<64x128xf32> to vector<128xf32>
    %27 = vector.shape_cast %26 : vector<128xf32> to vector<1x128xf32>
    %28 = arith.addf %20, %27 : vector<1x128xf32>
    %29 = vector.extract_strided_slice %2 {offsets = [192, 0], sizes = [64, 128], strides = [1, 1]} : vector<256x128xf32> to vector<64x128xf32>
    %cst_11 = arith.constant dense<0.000000e+00> : vector<128xf32>
    %30 = vector.multi_reduction <add>, %29, %cst_11 [0] : vector<64x128xf32> to vector<128xf32>
    %31 = vector.shape_cast %30 : vector<128xf32> to vector<1x128xf32>
    %32 = arith.addf %24, %31 : vector<1x128xf32>
    %33 = arith.mulf %29, %29 : vector<64x128xf32>
    %cst_12 = arith.constant dense<0.000000e+00> : vector<128xf32>
    %34 = vector.multi_reduction <add>, %33, %cst_12 [0] : vector<64x128xf32> to vector<128xf32>
    %35 = vector.shape_cast %34 : vector<128xf32> to vector<1x128xf32>
    %36 = arith.addf %28, %35 : vector<1x128xf32>
    %c0_13 = arith.constant 0 : index
    %c0_14 = arith.constant 0 : index
    %c0_15 = arith.constant 0 : index
    %37 = vector.load %arg3[%c0_13, %c0_14, %c0_15] : memref<1x1x128xf32, #tpu.memory_space<vmem>>, vector<1x1x128xf32>
    %38 = vector.shape_cast %37 : vector<1x1x128xf32> to vector<1x128xf32>
    %39 = vector.shape_cast %32 : vector<1x128xf32> to vector<1x1x128xf32>
    tpu.vector_store %arg3[%c0_13, %c0_14, %c0_15], %39 {strides = array<i32>} : memref<1x1x128xf32, #tpu.memory_space<vmem>>, vector<1x1x128xf32>,
    %c0_16 = arith.constant 0 : index
    %c0_17 = arith.constant 0 : index
    %c0_18 = arith.constant 0 : index
    %40 = vector.load %arg4[%c0_16, %c0_17, %c0_18] : memref<1x1x128xf32, #tpu.memory_space<vmem>>, vector<1x1x128xf32>
    %41 = vector.shape_cast %40 : vector<1x1x128xf32> to vector<1x128xf32>
    %42 = vector.shape_cast %36 : vector<1x128xf32> to vector<1x1x128xf32>
    tpu.vector_store %arg4[%c0_16, %c0_17, %c0_18], %42 {strides = array<i32>} : memref<1x1x128xf32, #tpu.memory_space<vmem>>, vector<1x1x128xf32>,
    return
  }
  func.func @transform_0(%arg0: i32) -> (i32, i32) {
    %c0_i32 = arith.constant 0 : i32
    %c0_i32_0 = arith.constant 0 : i32
    return %arg0, %c0_i32 : i32, i32
  }
  func.func @transform_1(%arg0: i32) -> (i32, i32) {
    %c0_i32 = arith.constant 0 : i32
    %c0_i32_0 = arith.constant 0 : i32
    %c0_i32_1 = arith.constant 0 : i32
    return %c0_i32, %c0_i32_0 : i32, i32
  }
  func.func @transform_2(%arg0: i32) -> (i32, i32, i32) {
    %c0_i32 = arith.constant 0 : i32
    %c0_i32_0 = arith.constant 0 : i32
    %c0_i32_1 = arith.constant 0 : i32
    return %arg0, %c0_i32, %c0_i32_0 : i32, i32, i32
  }
  func.func @transform_3(%arg0: i32) -> (i32, i32, i32) {
    %c0_i32 = arith.constant 0 : i32
    %c0_i32_0 = arith.constant 0 : i32
    %c0_i32_1 = arith.constant 0 : i32
    return %arg0, %c0_i32, %c0_i32_0 : i32, i32, i32
  }
}

</mosaic_0001>

<llo_original>
// kernel: tpu_custom_call.1
$region0: #{tpu_custom_call.1}
  #allocation0 [shape = 'u32[]', space=smem, size = 0x4, offset = 0x4, fixed_abs, tag = 'smem constant byte address 0x4 - core index']
  #allocation1 [shape = 'u32[144,128]{1,0:T(1,128)}', space=vmem, size = 0x12000, scoped, tag = 'internal scratch']
  %s0 = inlined_call_operand.hbm [shape: f32[512,128], index: 0, kind: input, shape index: {}]
  %s1 = inlined_call_operand.hbm [shape: f32[128,128], index: 1, kind: input, shape index: {}]
  %s2 = inlined_call_operand.hbm [shape: f32[2,1,128], index: 2, kind: output, shape index: {0}]
  %s3 = inlined_call_operand.hbm [shape: f32[2,1,128], index: 3, kind: output, shape index: {1}]
  %4 = xla_tuple %s2, %s3
  %s5 = sld [smem:[#allocation0]]
  $region57: #{tpu_custom_call.1} parent=0
    _
  %s7 = ssub.s32 1, %s5
  %s8 = scalar_select 0, %s7, %s5
  $region1: #{tpu_custom_call.1} parent=0
    #allocation2 [shape = 'u8[262144]{0}', space=vmem, size = 0x40000, scoped, tag = 'input window, operand 0']
    #allocation3 [shape = 's32[2]{0}', space=sflag, size = 0x8, scoped, tag = 'scoped memory for tpu_custom_call.1']
    #allocation4 [shape = 's32[2]{0}', space=sflag, size = 0x8, scoped, tag = 'scoped memory for tpu_custom_call.1']
    #allocation5 [shape = 'u8[65536]{0}', space=vmem, size = 0x10000, scoped, tag = 'input window, operand 1, single buffered']
    #allocation6 [shape = 's32[1]{0}', space=sflag, size = 0x4, scoped, tag = 'scoped memory for tpu_custom_call.1']
    #allocation7 [shape = 'u8[1024]{0}', space=vmem, size = 0x400, scoped, tag = 'output window, operand 0']
    #allocation8 [shape = 'u8[1024]{0}', space=vmem, size = 0x400, scoped, tag = 'output window, operand 1']
    #allocation9 [shape = 's32[2]{0}', space=sflag, size = 0x8, scoped, tag = 'scoped memory for tpu_custom_call.1']
    %9 = vsyncpa [#allocation3], 0
    %s10 = scalar_lea.sflag [#allocation3], 1
    %11 = vsyncpa %s10, 0
    %12 = vsyncpa [#allocation6], 0
    %13 = vsyncpa [#allocation4], 0
    %s14 = scalar_lea.sflag [#allocation4], 1
    %15 = vsyncpa %s14, 0
    %16 = vsyncpa [#allocation9], 0
    %s17 = scalar_lea.sflag [#allocation9], 1
    %18 = vsyncpa %s17, 0
    loop: start=0, step=1, limit=4
    $region2: #{tpu_custom_call.1} parent=1 // loop_pre_header
      _
    $region3: #{tpu_custom_call.1} parent=1 // loop_header
      %s20 = sphi 0, %s24
      %p21 = scmp.ge.s32.totalorder %s20, 4
      %s30 = sphi 0, %s32
      %s33 = sphi 0, %s30
      %s34 = sphi 0, %s33
      %s50 = sphi 0, %s34
      %s54 = sphi 0, %s54
      %s56 = sphi 0, %s54
      %s57 = sphi 0, %s56
      %s71 = sphi 0, %s57
      %s77 = sphi 0, %s79
      %s80 = sphi 0, %s77
      %s81 = sphi 0, %s80
      %s97 = sphi 0, %s81
      %s103 = sphi 0, %s105
      %s106 = sphi 0, %s103
      %s107 = sphi 0, %s106
      %s123 = sphi 0, %s107
    $region4: #{tpu_custom_call.1} parent=1 // loop_header_branch
      %23 = sbr.rel (%p21) target = $region8
    $region5: #{tpu_custom_call.1} parent=1 // loop_body
      %s25 = ssub.s32 %s20, 1
      %s26 = ssub.s32 %s20, 2
      %s27 = sadd.s32 %s20, 1
      %s28 = ssub.s32 %s20, %s27
      %p29 = scmp.eq.s32.totalorder %s28, 0
      %s31 = sadd.s32 %s30, 1
      %s32 = scalar_select %p29, %s30, %s31
      %p35 = pneg %p29
      %p36 = scmp.eq.s32.totalorder %s20, 1
      %p37 = por %p35, %p36
      %p38 = scmp.ne.s32.totalorder %s30, %s33
      %p39 = scmp.eq.s32.totalorder %s20, 0
      %p40 = por %p38, %p39
      %p41 = scmp.ne.s32.totalorder %s30, %s33
      %p42 = scmp.eq.s32.totalorder %s25, 1
      %p43 = por %p41, %p42
      %p44 = scmp.ne.s32.totalorder %s33, %s34
      %p45 = scmp.eq.s32.totalorder %s25, 0
      %p46 = por %p44, %p45
      %p47 = scmp.ne.s32.totalorder %s33, %s34
      %p48 = scmp.eq.s32.totalorder %s26, 1
      %p49 = por %p47, %p48
      %p51 = scmp.ne.s32.totalorder %s34, %s50
      %p52 = scmp.eq.s32.totalorder %s26, 0
      %p53 = por %p51, %p52
      %s55 = sadd.s32 %s54, 1
      %p58 = scmp.eq.s32.totalorder %s20, 1
      %p59 = scmp.ne.s32.totalorder %s54, %s56
      %p60 = scmp.eq.s32.totalorder %s20, 0
      %p61 = por %p59, %p60
      %p62 = scmp.ne.s32.totalorder %s54, %s56
      %p63 = scmp.eq.s32.totalorder %s25, 1
      %p64 = por %p62, %p63
      %p65 = scmp.ne.s32.totalorder %s56, %s57
      %p66 = scmp.eq.s32.totalorder %s25, 0
      %p67 = por %p65, %p66
      %p68 = scmp.ne.s32.totalorder %s56, %s57
      %p69 = scmp.eq.s32.totalorder %s26, 1
      %p70 = por %p68, %p69
      %p72 = scmp.ne.s32.totalorder %s57, %s71
      %p73 = scmp.eq.s32.totalorder %s26, 0
      %p74 = por %p72, %p73
      %s75 = ssub.s32 %s20, %s27
      %p76 = scmp.eq.s32.totalorder %s75, 0
      %s78 = sadd.s32 %s77, 1
      %s79 = scalar_select %p76, %s77, %s78
      %p82 = pneg %p76
      %p83 = scmp.eq.s32.totalorder %s20, 1
      %p84 = por %p82, %p83
      %p85 = scmp.ne.s32.totalorder %s77, %s80
      %p86 = scmp.eq.s32.totalorder %s20, 0
      %p87 = por %p85, %p86
      %p88 = scmp.ne.s32.totalorder %s77, %s80
      %p89 = scmp.eq.s32.totalorder %s25, 1
      %p90 = por %p88, %p89
      %p91 = scmp.ne.s32.totalorder %s80, %s81
      %p92 = scmp.eq.s32.totalorder %s25, 0
      %p93 = por %p91, %p92
      %p94 = scmp.ne.s32.totalorder %s80, %s81
      %p95 = scmp.eq.s32.totalorder %s26, 1
      %p96 = por %p94, %p95
      %p98 = scmp.ne.s32.totalorder %s81, %s97
      %p99 = scmp.eq.s32.totalorder %s26, 0
      %p100 = por %p98, %p99
      %s101 = ssub.s32 %s20, %s27
      %p102 = scmp.eq.s32.totalorder %s101, 0
      %s104 = sadd.s32 %s103, 1
      %s105 = scalar_select %p102, %s103, %s104
      %p108 = pneg %p102
      %p109 = scmp.eq.s32.totalorder %s20, 1
      %p110 = por %p108, %p109
      %p111 = scmp.ne.s32.totalorder %s103, %s106
      %p112 = scmp.eq.s32.totalorder %s20, 0
      %p113 = por %p111, %p112
      %p114 = scmp.ne.s32.totalorder %s103, %s106
      %p115 = scmp.eq.s32.totalorder %s25, 1
      %p116 = por %p114, %p115
      %p117 = scmp.ne.s32.totalorder %s106, %s107
      %p118 = scmp.eq.s32.totalorder %s25, 0
      %p119 = por %p117, %p118
      %p120 = scmp.ne.s32.totalorder %s106, %s107
      %p121 = scmp.eq.s32.totalorder %s26, 1
      %p122 = por %p120, %p121
      %p124 = scmp.ne.s32.totalorder %s107, %s123
      %p125 = scmp.eq.s32.totalorder %s26, 0
      %p126 = por %p124, %p125
      %p127 = scmp.le.s32.totalorder 1, %s20
      %p128 = scmp.lt.s32.totalorder %s20, 3
      %p129 = pnand %p127, %p128
      %p130 = pneg %p129
      // Predicated region
      $region9: #{tpu_custom_call.1} parent=5 // pred_check
        _
      $region10: #{tpu_custom_call.1} parent=5 // pred_check_branch
        %132 = sbr.rel (%p129) target = $region12
      $region11: #{tpu_custom_call.1} parent=5 // pred_region
        %s133 = ssub.s32 %s20, 1
        // Predicated region
        $region13: #{tpu_custom_call.1} parent=11 // pred_check
          %p134 = pneg %p67
        $region14: #{tpu_custom_call.1} parent=11 // pred_check_branch
          %136 = sbr.rel (%p134) target = $region16
        $region15: #{tpu_custom_call.1} parent=11 // pred_region
          %s138 = ssub.s32 2048, 2048
          %139 = vsyncadd [#allocation6], %s138
          %s140 = sshll.u32 [#allocation5], 4
          %s141 = int_to_ptr.vmem [resolvable:$true] %s140
          %146 = dma.hbm_to_vmem [thread:$0]  %s1, 2048, %s141, [#allocation6], 128, 128, 8
        $region16: #{tpu_custom_call.1} parent=11 // pred_fallthru
          _
      $region12: #{tpu_custom_call.1} parent=5 // pred_fallthru
        _
      %p147 = scmp.lt.s32.totalorder %s20, 2
      // Predicated region
      $region17: #{tpu_custom_call.1} parent=5 // pred_check
        %p148 = pneg %p147
      $region18: #{tpu_custom_call.1} parent=5 // pred_check_branch
        %150 = sbr.rel (%p148) target = $region20
      $region19: #{tpu_custom_call.1} parent=5 // pred_region
        // Predicated region
        $region21: #{tpu_custom_call.1} parent=19 // pred_check
          %p151 = pneg %p40
        $region22: #{tpu_custom_call.1} parent=19 // pred_check_branch
          %153 = sbr.rel (%p151) target = $region24
        $region23: #{tpu_custom_call.1} parent=19 // pred_region
          %s154 = sand.u32 %s30, 1
          %s155 = scalar_lea.sflag [#allocation3], %s154
          %s156 = sand.u32 %s30, 1
          %s157 = smul.addr %s156, 256
          %s158 = scalar_lea.vmem [#allocation2], %s157
          %s159 = smul.u32 32, %s20
          %s161 = ssub.s32 4096, 4096
          %162 = vsyncadd %s155, %s161
          %s163 = smul.addr %s159, 128
          %s164 = scalar_lea.hbm %s0, %s163
          %s165 = sshll.u32 %s158, 4
          %s166 = int_to_ptr.vmem [resolvable:$true] %s165
          %171 = dma.hbm_to_vmem [thread:$0]  %s164, 4096, %s166, %s155, 128, 128, 8
        $region24: #{tpu_custom_call.1} parent=19 // pred_fallthru
          _
      $region20: #{tpu_custom_call.1} parent=5 // pred_fallthru
        _
      %p172 = scmp.le.s32.totalorder 1, %s20
      %p173 = scmp.lt.s32.totalorder %s20, 3
      %p174 = pnand %p172, %p173
      %p175 = pneg %p174
      // Predicated region
      $region25: #{tpu_custom_call.1} parent=5 // pred_check
        _
      $region26: #{tpu_custom_call.1} parent=5 // pred_check_branch
        %177 = sbr.rel (%p174) target = $region28
      $region27: #{tpu_custom_call.1} parent=5 // pred_region
        %s178 = ssub.s32 %s20, 1
        %s179 = sand.u32 %s33, 1
        %s180 = scalar_lea.sflag [#allocation3], %s179
        %s181 = sand.u32 %s33, 1
        %s182 = smul.addr %s181, 256
        %s183 = scalar_lea.vmem [#allocation2], %s182
        // Predicated region
        $region29: #{tpu_custom_call.1} parent=27 // pred_check
          %p184 = pneg %p46
        $region30: #{tpu_custom_call.1} parent=27 // pred_check_branch
          %186 = sbr.rel (%p184) target = $region32
        $region31: #{tpu_custom_call.1} parent=27 // pred_region
          %187 = dma.done %s180, 4096
        $region32: #{tpu_custom_call.1} parent=27 // pred_fallthru
          _
        // Predicated region
        $region33: #{tpu_custom_call.1} parent=27 // pred_check
          %p188 = pneg %p67
        $region34: #{tpu_custom_call.1} parent=27 // pred_check_branch
          %190 = sbr.rel (%p188) target = $region36
        $region35: #{tpu_custom_call.1} parent=27 // pred_region
          %191 = dma.done [#allocation6], 2048
        $region36: #{tpu_custom_call.1} parent=27 // pred_fallthru
          _
        %s192 = sand.u32 %s33, 1
        %s193 = scalar_lea.sflag [#allocation3], %s192
        %s194 = sand.u32 %s33, 1
        %s195 = smul.addr %s194, 256
        %s196 = scalar_lea.vmem [#allocation2], %s195
        %p197 = pneg %p46
        %p198 = pneg %p43
        %p199 = pneg %p67
        %p200 = pneg %p64
        %p201 = pneg %p93
        %p202 = pneg %p90
        %s203 = sand.u32 %s80, 1
        %s204 = scalar_lea.sflag [#allocation4], %s203
        %s205 = sand.u32 %s80, 1
        %s206 = scalar_lea.vmem [#allocation7], %s205
        %p207 = pneg %p119
        %p208 = pneg %p116
        %s209 = sand.u32 %s106, 1
        %s210 = scalar_lea.sflag [#allocation9], %s209
        %s211 = sand.u32 %s106, 1
        %s212 = scalar_lea.vmem [#allocation8], %s211
        %s213 = smul.u32 32, %s25
        %v214 = vld [vmem:[%s183] sm:$0xff]
        %v215 = vld [vmem:[%s183 + $0x8] sm:$0xff]
        %v216 = vld [vmem:[%s183 + $0x10] sm:$0xff]
        %v217 = vld [vmem:[%s183 + $0x18] sm:$0xff]
        %v218 = vld [vmem:[%s183 + $0x20] sm:$0xff]
        %v219 = vld [vmem:[%s183 + $0x28] sm:$0xff]
        %v220 = vld [vmem:[%s183 + $0x30] sm:$0xff]
        %v221 = vld [vmem:[%s183 + $0x38] sm:$0xff]
        %v222 = vld [vmem:[%s183 + $0x40] sm:$0xff]
        %v223 = vld [vmem:[%s183 + $0x48] sm:$0xff]
        %v224 = vld [vmem:[%s183 + $0x50] sm:$0xff]
        %v225 = vld [vmem:[%s183 + $0x58] sm:$0xff]
        %v226 = vld [vmem:[%s183 + $0x60] sm:$0xff]
        %v227 = vld [vmem:[%s183 + $0x68] sm:$0xff]
        %v228 = vld [vmem:[%s183 + $0x70] sm:$0xff]
        %v229 = vld [vmem:[%s183 + $0x78] sm:$0xff]
        %v230 = vld [vmem:[%s183 + $0x80] sm:$0xff]
        %v231 = vld [vmem:[%s183 + $0x88] sm:$0xff]
        %v232 = vld [vmem:[%s183 + $0x90] sm:$0xff]
        %v233 = vld [vmem:[%s183 + $0x98] sm:$0xff]
        %v234 = vld [vmem:[%s183 + $0xa0] sm:$0xff]
        %v235 = vld [vmem:[%s183 + $0xa8] sm:$0xff]
        %v236 = vld [vmem:[%s183 + $0xb0] sm:$0xff]
        %v237 = vld [vmem:[%s183 + $0xb8] sm:$0xff]
        %v238 = vld [vmem:[%s183 + $0xc0] sm:$0xff]
        %v239 = vld [vmem:[%s183 + $0xc8] sm:$0xff]
        %v240 = vld [vmem:[%s183 + $0xd0] sm:$0xff]
        %v241 = vld [vmem:[%s183 + $0xd8] sm:$0xff]
        %v242 = vld [vmem:[%s183 + $0xe0] sm:$0xff]
        %v243 = vld [vmem:[%s183 + $0xe8] sm:$0xff]
        %v244 = vld [vmem:[%s183 + $0xf0] sm:$0xff]
        %v245 = vld [vmem:[%s183 + $0xf8] sm:$0xff]
        %v246 = vld [vmem:[#allocation5] sm:$0xff]
        %v247 = vld [vmem:[#allocation5 + $0x8] sm:$0xff]
        %v248 = vld [vmem:[#allocation5 + $0x10] sm:$0xff]
        %v249 = vld [vmem:[#allocation5 + $0x18] sm:$0xff]
        %v250 = vld [vmem:[#allocation5 + $0x20] sm:$0xff]
        %v251 = vld [vmem:[#allocation5 + $0x28] sm:$0xff]
        %v252 = vld [vmem:[#allocation5 + $0x30] sm:$0xff]
        %v253 = vld [vmem:[#allocation5 + $0x38] sm:$0xff]
        %v254 = vld [vmem:[#allocation5 + $0x40] sm:$0xff]
        %v255 = vld [vmem:[#allocation5 + $0x48] sm:$0xff]
        %v256 = vld [vmem:[#allocation5 + $0x50] sm:$0xff]
        %v257 = vld [vmem:[#allocation5 + $0x58] sm:$0xff]
        %v258 = vld [vmem:[#allocation5 + $0x60] sm:$0xff]
        %v259 = vld [vmem:[#allocation5 + $0x68] sm:$0xff]
        %v260 = vld [vmem:[#allocation5 + $0x70] sm:$0xff]
        %v261 = vld [vmem:[#allocation5 + $0x78] sm:$0xff]
        %262 = vmatprep.subr.mxu0 0.0
        %263 = vmatpush1.msra.mxu0 %v246
        %264 = vmatprep.subr.mxu0 0.0
        %265 = vmatpush1.msra.mxu0 %v247
        %266 = vmatprep.subr.mxu0 0.0
        %267 = vmatpush1.msra.mxu0 %v248
        %268 = vmatprep.subr.mxu0 0.0
        %269 = vmatpush1.msra.mxu0 %v249
        %270 = vmatprep.subr.mxu0 0.0
        %271 = vmatpush1.msra.mxu0 %v250
        %272 = vmatprep.subr.mxu0 0.0
        %273 = vmatpush1.msra.mxu0 %v251
        %274 = vmatprep.subr.mxu0 0.0
        %275 = vmatpush1.msra.mxu0 %v252
        %276 = vmatprep.subr.mxu0 0.0
        %277 = vmatpush1.msra.mxu0 %v253
        %278 = vmatprep.subr.mxu0 0.0
        %279 = vmatpush1.msra.mxu0 %v254
        %280 = vmatprep.subr.mxu0 0.0
        %281 = vmatpush1.msra.mxu0 %v255
        %282 = vmatprep.subr.mxu0 0.0
        %283 = vmatpush1.msra.mxu0 %v256
        %284 = vmatprep.subr.mxu0 0.0
        %285 = vmatpush1.msra.mxu0 %v257
        %286 = vmatprep.subr.mxu0 0.0
        %287 = vmatpush1.msra.mxu0 %v258
        %288 = vmatprep.subr.mxu0 0.0
        %289 = vmatpush1.msra.mxu0 %v259
        %290 = vmatprep.subr.mxu0 0.0
        %291 = vmatpush1.msra.mxu0 %v260
        %292 = vmatprep.subr.mxu0 0.0
        %293 = vmatpush1.msra.mxu0 %v261
        %294 = vmatprep.subr.mxu0 0.0
        %295 = vmatpush1.msra.mxu0 0.0
        %296 = vmatprep.subr.mxu0 0.0
        %297 = vmatpush1.msra.mxu0 0.0
        %298 = vmatprep.subr.mxu0 0.0
        %299 = vmatpush1.msra.mxu0 0.0
        %300 = vmatprep.subr.mxu0 0.0
        %301 = vmatpush1.msra.mxu0 0.0
        %302 = vmatprep.subr.mxu0 0.0
        %303 = vmatpush1.msra.mxu0 0.0
        %304 = vmatprep.subr.mxu0 0.0
        %305 = vmatpush1.msra.mxu0 0.0
        %306 = vmatprep.subr.mxu0 0.0
        %307 = vmatpush1.msra.mxu0 0.0
        %308 = vmatprep.subr.mxu0 0.0
        %309 = vmatpush1.msra.mxu0 0.0
        %310 = vmatprep.subr.mxu0 0.0
        %311 = vmatpush1.msra.mxu0 0.0
        %312 = vmatprep.subr.mxu0 0.0
        %313 = vmatpush1.msra.mxu0 0.0
        %314 = vmatprep.subr.mxu0 0.0
        %315 = vmatpush1.msra.mxu0 0.0
        %316 = vmatprep.subr.mxu0 0.0
        %317 = vmatpush1.msra.mxu0 0.0
        %318 = vmatprep.subr.mxu0 0.0
        %319 = vmatpush1.msra.mxu0 0.0
        %320 = vmatprep.subr.mxu0 0.0
        %321 = vmatpush1.msra.mxu0 0.0
        %322 = vmatprep.subr.mxu0 0.0
        %323 = vmatpush1.msra.mxu0 0.0
        %324 = vmatprep.subr.mxu0 0.0
        %325 = vmatpush1.msra.mxu0 0.0
        %326 = vmatprep.mubr.f32.mxu0 0.0
        %327 = vmatmul.mubr.f32.gmra.mrb[0].mxu0 %v214
        %v328 = vpop.f32.mrb[0].mxu0
        %v329 = vadd.f32 0.0, %v328
        %v330 = vpop.f32.mrb[0].mxu0
        %331 = vmatprep.mubr.f32.mxu0 0.0
        %332 = vmatmul.mubr.f32.gmra.mrb[0].mxu0 %v215
        %v333 = vpop.f32.mrb[0].mxu0
        %v334 = vadd.f32 0.0, %v333
        %v335 = vpop.f32.mrb[0].mxu0
        %336 = vmatprep.mubr.f32.mxu0 0.0
        %337 = vmatmul.mubr.f32.gmra.mrb[0].mxu0 %v216
        %v338 = vpop.f32.mrb[0].mxu0
        %v339 = vadd.f32 0.0, %v338
        %v340 = vpop.f32.mrb[0].mxu0
        %341 = vmatprep.mubr.f32.mxu0 0.0
        %342 = vmatmul.mubr.f32.gmra.mrb[0].mxu0 %v217
        %v343 = vpop.f32.mrb[0].mxu0
        %v344 = vadd.f32 0.0, %v343
        %v345 = vpop.f32.mrb[0].mxu0
        %346 = vmatprep.mubr.f32.mxu0 0.0
        %347 = vmatmul.mubr.f32.gmra.mrb[0].mxu0 %v218
        %v348 = vpop.f32.mrb[0].mxu0
        %v349 = vadd.f32 0.0, %v348
        %v350 = vpop.f32.mrb[0].mxu0
        %351 = vmatprep.mubr.f32.mxu0 0.0
        %352 = vmatmul.mubr.f32.gmra.mrb[0].mxu0 %v219
        %v353 = vpop.f32.mrb[0].mxu0
        %v354 = vadd.f32 0.0, %v353
        %v355 = vpop.f32.mrb[0].mxu0
        %356 = vmatprep.mubr.f32.mxu0 0.0
        %357 = vmatmul.mubr.f32.gmra.mrb[0].mxu0 %v220
        %v358 = vpop.f32.mrb[0].mxu0
        %v359 = vadd.f32 0.0, %v358
        %v360 = vpop.f32.mrb[0].mxu0
        %361 = vmatprep.mubr.f32.mxu0 0.0
        %362 = vmatmul.mubr.f32.gmra.mrb[0].mxu0 %v221
        %v363 = vpop.f32.mrb[0].mxu0
        %v364 = vadd.f32 0.0, %v363
        %v365 = vpop.f32.mrb[0].mxu0
        %366 = vmatprep.mubr.f32.mxu0 0.0
        %367 = vmatmul.mubr.f32.gmra.mrb[0].mxu0 %v222
        %v368 = vpop.f32.mrb[0].mxu0
        %v369 = vadd.f32 0.0, %v368
        %v370 = vpop.f32.mrb[0].mxu0
        %371 = vmatprep.mubr.f32.mxu0 0.0
        %372 = vmatmul.mubr.f32.gmra.mrb[0].mxu0 %v223
        %v373 = vpop.f32.mrb[0].mxu0
        %v374 = vadd.f32 0.0, %v373
        %v375 = vpop.f32.mrb[0].mxu0
        %376 = vmatprep.mubr.f32.mxu0 0.0
        %377 = vmatmul.mubr.f32.gmra.mrb[0].mxu0 %v224
        %v378 = vpop.f32.mrb[0].mxu0
        %v379 = vadd.f32 0.0, %v378
        %v380 = vpop.f32.mrb[0].mxu0
        %381 = vmatprep.mubr.f32.mxu0 0.0
        %382 = vmatmul.mubr.f32.gmra.mrb[0].mxu0 %v225
        %v383 = vpop.f32.mrb[0].mxu0
        %v384 = vadd.f32 0.0, %v383
        %v385 = vpop.f32.mrb[0].mxu0
        %386 = vmatprep.mubr.f32.mxu0 0.0
        %387 = vmatmul.mubr.f32.gmra.mrb[0].mxu0 %v226
        %v388 = vpop.f32.mrb[0].mxu0
        %v389 = vadd.f32 0.0, %v388
        %v390 = vpop.f32.mrb[0].mxu0
        %391 = vmatprep.mubr.f32.mxu0 0.0
        %392 = vmatmul.mubr.f32.gmra.mrb[0].mxu0 %v227
        %v393 = vpop.f32.mrb[0].mxu0
        %v394 = vadd.f32 0.0, %v393
        %v395 = vpop.f32.mrb[0].mxu0
        %396 = vmatprep.mubr.f32.mxu0 0.0
        %397 = vmatmul.mubr.f32.gmra.mrb[0].mxu0 %v228
        %v398 = vpop.f32.mrb[0].mxu0
        %v399 = vadd.f32 0.0, %v398
        %v400 = vpop.f32.mrb[0].mxu0
        %401 = vmatprep.mubr.f32.mxu0 0.0
        %402 = vmatmul.mubr.f32.gmra.mrb[0].mxu0 %v229
        %v403 = vpop.f32.mrb[0].mxu0
        %v404 = vadd.f32 0.0, %v403
        %v405 = vpop.f32.mrb[0].mxu0
        %406 = vmatprep.mubr.f32.mxu0 0.0
        %407 = vmatmul.mubr.f32.gmra.mrb[0].mxu0 %v230
        %v408 = vpop.f32.mrb[0].mxu0
        %v409 = vadd.f32 0.0, %v408
        %v410 = vpop.f32.mrb[0].mxu0
        %411 = vmatprep.mubr.f32.mxu0 0.0
        %412 = vmatmul.mubr.f32.gmra.mrb[0].mxu0 %v231
        %v413 = vpop.f32.mrb[0].mxu0
        %v414 = vadd.f32 0.0, %v413
        %v415 = vpop.f32.mrb[0].mxu0
        %416 = vmatprep.mubr.f32.mxu0 0.0
        %417 = vmatmul.mubr.f32.gmra.mrb[0].mxu0 %v232
        %v418 = vpop.f32.mrb[0].mxu0
        %v419 = vadd.f32 0.0, %v418
        %v420 = vpop.f32.mrb[0].mxu0
        %421 = vmatprep.mubr.f32.mxu0 0.0
        %422 = vmatmul.mubr.f32.gmra.mrb[0].mxu0 %v233
        %v423 = vpop.f32.mrb[0].mxu0
        %v424 = vadd.f32 0.0, %v423
        %v425 = vpop.f32.mrb[0].mxu0
        %426 = vmatprep.mubr.f32.mxu0 0.0
        %427 = vmatmul.mubr.f32.gmra.mrb[0].mxu0 %v234
        %v428 = vpop.f32.mrb[0].mxu0
        %v429 = vadd.f32 0.0, %v428
        %v430 = vpop.f32.mrb[0].mxu0
        %431 = vmatprep.mubr.f32.mxu0 0.0
        %432 = vmatmul.mubr.f32.gmra.mrb[0].mxu0 %v235
        %v433 = vpop.f32.mrb[0].mxu0
        %v434 = vadd.f32 0.0, %v433
        %v435 = vpop.f32.mrb[0].mxu0
        %436 = vmatprep.mubr.f32.mxu0 0.0
        %437 = vmatmul.mubr.f32.gmra.mrb[0].mxu0 %v236
        %v438 = vpop.f32.mrb[0].mxu0
        %v439 = vadd.f32 0.0, %v438
        %v440 = vpop.f32.mrb[0].mxu0
        %441 = vmatprep.mubr.f32.mxu0 0.0
        %442 = vmatmul.mubr.f32.gmra.mrb[0].mxu0 %v237
        %v443 = vpop.f32.mrb[0].mxu0
        %v444 = vadd.f32 0.0, %v443
        %v445 = vpop.f32.mrb[0].mxu0
        %446 = vmatprep.mubr.f32.mxu0 0.0
        %447 = vmatmul.mubr.f32.gmra.mrb[0].mxu0 %v238
        %v448 = vpop.f32.mrb[0].mxu0
        %v449 = vadd.f32 0.0, %v448
        %v450 = vpop.f32.mrb[0].mxu0
        %451 = vmatprep.mubr.f32.mxu0 0.0
        %452 = vmatmul.mubr.f32.gmra.mrb[0].mxu0 %v239
        %v453 = vpop.f32.mrb[0].mxu0
        %v454 = vadd.f32 0.0, %v453
        %v455 = vpop.f32.mrb[0].mxu0
        %456 = vmatprep.mubr.f32.mxu0 0.0
        %457 = vmatmul.mubr.f32.gmra.mrb[0].mxu0 %v240
        %v458 = vpop.f32.mrb[0].mxu0
        %v459 = vadd.f32 0.0, %v458
        %v460 = vpop.f32.mrb[0].mxu0
        %461 = vmatprep.mubr.f32.mxu0 0.0
        %462 = vmatmul.mubr.f32.gmra.mrb[0].mxu0 %v241
        %v463 = vpop.f32.mrb[0].mxu0
        %v464 = vadd.f32 0.0, %v463
        %v465 = vpop.f32.mrb[0].mxu0
        %466 = vmatprep.mubr.f32.mxu0 0.0
        %467 = vmatmul.mubr.f32.gmra.mrb[0].mxu0 %v242
        %v468 = vpop.f32.mrb[0].mxu0
        %v469 = vadd.f32 0.0, %v468
        %v470 = vpop.f32.mrb[0].mxu0
        %471 = vmatprep.mubr.f32.mxu0 0.0
        %472 = vmatmul.mubr.f32.gmra.mrb[0].mxu0 %v243
        %v473 = vpop.f32.mrb[0].mxu0
        %v474 = vadd.f32 0.0, %v473
        %v475 = vpop.f32.mrb[0].mxu0
        %476 = vmatprep.mubr.f32.mxu0 0.0
        %477 = vmatmul.mubr.f32.gmra.mrb[0].mxu0 %v244
        %v478 = vpop.f32.mrb[0].mxu0
        %v479 = vadd.f32 0.0, %v478
        %v480 = vpop.f32.mrb[0].mxu0
        %481 = vmatprep.mubr.f32.mxu0 0.0
        %482 = vmatmul.mubr.f32.gmra.mrb[0].mxu0 %v245
        %v483 = vpop.f32.mrb[0].mxu0
        %v484 = vadd.f32 0.0, %v483
        %v485 = vpop.f32.mrb[0].mxu0
        %486 = vdwg.mxu0
        %v487 = vadd.f32 %v329, %v334
        %v488 = vadd.f32 %v487, %v339
        %v489 = vadd.f32 %v488, %v344
        %v490 = vadd.f32 %v489, %v349
        %v491 = vadd.f32 %v490, %v354
        %v492 = vadd.f32 %v491, %v359
        %v493 = vadd.f32 %v492, %v364
        %v494 = vrot.slane %v493, 4
        %v495 = vadd.f32 %v493, %v494
        %v496 = vrot.slane %v495, 2
        %v497 = vadd.f32 %v495, %v496
        %v498 = vrot.slane %v497, 1
        %v499 = vadd.f32 %v497, %v498
        %v500 = vadd.f32 %v499, 0.0
        %v501 = vmul.f32 %v329, %v329
        %v502 = vmul.f32 %v334, %v334
        %v503 = vmul.f32 %v339, %v339
        %v504 = vmul.f32 %v344, %v344
        %v505 = vmul.f32 %v349, %v349
        %v506 = vmul.f32 %v354, %v354
        %v507 = vmul.f32 %v359, %v359
        %v508 = vmul.f32 %v364, %v364
        %v509 = vadd.f32 %v501, %v502
        %v510 = vadd.f32 %v509, %v503
        %v511 = vadd.f32 %v510, %v504
        %v512 = vadd.f32 %v511, %v505
        %v513 = vadd.f32 %v512, %v506
        %v514 = vadd.f32 %v513, %v507
        %v515 = vadd.f32 %v514, %v508
        %v516 = vrot.slane %v515, 4
        %v517 = vadd.f32 %v515, %v516
        %v518 = vrot.slane %v517, 2
        %v519 = vadd.f32 %v517, %v518
        %v520 = vrot.slane %v519, 1
        %v521 = vadd.f32 %v519, %v520
        %v522 = vadd.f32 %v521, 0.0
        %v523 = vadd.f32 %v369, %v374
        %v524 = vadd.f32 %v523, %v379
        %v525 = vadd.f32 %v524, %v384
        %v526 = vadd.f32 %v525, %v389
        %v527 = vadd.f32 %v526, %v394
        %v528 = vadd.f32 %v527, %v399
        %v529 = vadd.f32 %v528, %v404
        %v530 = vrot.slane %v529, 4
        %v531 = vadd.f32 %v529, %v530
        %v532 = vrot.slane %v531, 2
        %v533 = vadd.f32 %v531, %v532
        %v534 = vrot.slane %v533, 1
        %v535 = vadd.f32 %v533, %v534
        %v536 = vadd.f32 %v500, %v535
        %v537 = vmul.f32 %v369, %v369
        %v538 = vmul.f32 %v374, %v374
        %v539 = vmul.f32 %v379, %v379
        %v540 = vmul.f32 %v384, %v384
        %v541 = vmul.f32 %v389, %v389
        %v542 = vmul.f32 %v394, %v394
        %v543 = vmul.f32 %v399, %v399
        %v544 = vmul.f32 %v404, %v404
        %v545 = vadd.f32 %v537, %v538
        %v546 = vadd.f32 %v545, %v539
        %v547 = vadd.f32 %v546, %v540
        %v548 = vadd.f32 %v547, %v541
        %v549 = vadd.f32 %v548, %v542
        %v550 = vadd.f32 %v549, %v543
        %v551 = vadd.f32 %v550, %v544
        %v552 = vrot.slane %v551, 4
        %v553 = vadd.f32 %v551, %v552
        %v554 = vrot.slane %v553, 2
        %v555 = vadd.f32 %v553, %v554
        %v556 = vrot.slane %v555, 1
        %v557 = vadd.f32 %v555, %v556
        %v558 = vadd.f32 %v522, %v557
        %v559 = vadd.f32 %v409, %v414
        %v560 = vadd.f32 %v559, %v419
        %v561 = vadd.f32 %v560, %v424
        %v562 = vadd.f32 %v561, %v429
        %v563 = vadd.f32 %v562, %v434
        %v564 = vadd.f32 %v563, %v439
        %v565 = vadd.f32 %v564, %v444
        %v566 = vrot.slane %v565, 4
        %v567 = vadd.f32 %v565, %v566
        %v568 = vrot.slane %v567, 2
        %v569 = vadd.f32 %v567, %v568
        %v570 = vrot.slane %v569, 1
        %v571 = vadd.f32 %v569, %v570
        %v572 = vadd.f32 %v536, %v571
        %v573 = vmul.f32 %v409, %v409
        %v574 = vmul.f32 %v414, %v414
        %v575 = vmul.f32 %v419, %v419
        %v576 = vmul.f32 %v424, %v424
        %v577 = vmul.f32 %v429, %v429
        %v578 = vmul.f32 %v434, %v434
        %v579 = vmul.f32 %v439, %v439
        %v580 = vmul.f32 %v444, %v444
        %v581 = vadd.f32 %v573, %v574
        %v582 = vadd.f32 %v581, %v575
        %v583 = vadd.f32 %v582, %v576
        %v584 = vadd.f32 %v583, %v577
        %v585 = vadd.f32 %v584, %v578
        %v586 = vadd.f32 %v585, %v579
        %v587 = vadd.f32 %v586, %v580
        %v588 = vrot.slane %v587, 4
        %v589 = vadd.f32 %v587, %v588
        %v590 = vrot.slane %v589, 2
        %v591 = vadd.f32 %v589, %v590
        %v592 = vrot.slane %v591, 1
        %v593 = vadd.f32 %v591, %v592
        %v594 = vadd.f32 %v558, %v593
        %v595 = vadd.f32 %v449, %v454
        %v596 = vadd.f32 %v595, %v459
        %v597 = vadd.f32 %v596, %v464
        %v598 = vadd.f32 %v597, %v469
        %v599 = vadd.f32 %v598, %v474
        %v600 = vadd.f32 %v599, %v479
        %v601 = vadd.f32 %v600, %v484
        %v602 = vrot.slane %v601, 4
        %v603 = vadd.f32 %v601, %v602
        %v604 = vrot.slane %v603, 2
        %v605 = vadd.f32 %v603, %v604
        %v606 = vrot.slane %v605, 1
        %v607 = vadd.f32 %v605, %v606
        %v608 = vadd.f32 %v572, %v607
        %v609 = vmul.f32 %v449, %v449
        %v610 = vmul.f32 %v454, %v454
        %v611 = vmul.f32 %v459, %v459
        %v612 = vmul.f32 %v464, %v464
        %v613 = vmul.f32 %v469, %v469
        %v614 = vmul.f32 %v474, %v474
        %v615 = vmul.f32 %v479, %v479
        %v616 = vmul.f32 %v484, %v484
        %v617 = vadd.f32 %v609, %v610
        %v618 = vadd.f32 %v617, %v611
        %v619 = vadd.f32 %v618, %v612
        %v620 = vadd.f32 %v619, %v613
        %v621 = vadd.f32 %v620, %v614
        %v622 = vadd.f32 %v621, %v615
        %v623 = vadd.f32 %v622, %v616
        %v624 = vrot.slane %v623, 4
        %v625 = vadd.f32 %v623, %v624
        %v626 = vrot.slane %v625, 2
        %v627 = vadd.f32 %v625, %v626
        %v628 = vrot.slane %v627, 1
        %v629 = vadd.f32 %v627, %v628
        %v630 = vadd.f32 %v594, %v629
        %631 = vst [vmem:[%s206] sm:$0x1] %v608
        %632 = vst [vmem:[%s212] sm:$0x1] %v630
        %s633 = sand.u32 %s80, 1
        %s634 = scalar_lea.sflag [#allocation4], %s633
        %s635 = sand.u32 %s80, 1
        %s636 = scalar_lea.vmem [#allocation7], %s635
        %s637 = sand.u32 %s106, 1
        %s638 = scalar_lea.sflag [#allocation9], %s637
        %s639 = sand.u32 %s106, 1
        %s640 = scalar_lea.vmem [#allocation8], %s639
        // Predicated region
        $region37: #{tpu_custom_call.1} parent=27 // pred_check
          %p641 = pneg %p90
        $region38: #{tpu_custom_call.1} parent=27 // pred_check_branch
          %643 = sbr.rel (%p641) target = $region40
        $region39: #{tpu_custom_call.1} parent=27 // pred_region
          %s645 = ssub.s32 16, 16
          %646 = vsyncadd %s634, %s645
          %s647 = smul.addr %s25, 16
          %s648 = scalar_lea.hbm %s2, %s647
          %s650 = sshll.u32 %s636, 4
          %s651 = int_to_ptr.vmem [resolvable:$true] %s650
          %653 = dma.vmem_to_hbm [thread:$0]  %s651, 16, %s648, %s634
        $region40: #{tpu_custom_call.1} parent=27 // pred_fallthru
          _
        // Predicated region
        $region41: #{tpu_custom_call.1} parent=27 // pred_check
          %p654 = pneg %p116
        $region42: #{tpu_custom_call.1} parent=27 // pred_check_branch
          %656 = sbr.rel (%p654) target = $region44
        $region43: #{tpu_custom_call.1} parent=27 // pred_region
          %s658 = ssub.s32 16, 16
          %659 = vsyncadd %s638, %s658
          %s660 = smul.addr %s25, 16
          %s661 = scalar_lea.hbm %s3, %s660
          %s663 = sshll.u32 %s640, 4
          %s664 = int_to_ptr.vmem [resolvable:$true] %s663
          %666 = dma.vmem_to_hbm [thread:$0]  %s664, 16, %s661, %s638
        $region44: #{tpu_custom_call.1} parent=27 // pred_fallthru
          _
      $region28: #{tpu_custom_call.1} parent=5 // pred_fallthru
        _
      %p667 = scmp.le.s32.totalorder 2, %s20
      // Predicated region
      $region45: #{tpu_custom_call.1} parent=5 // pred_check
        %p668 = pneg %p667
      $region46: #{tpu_custom_call.1} parent=5 // pred_check_branch
        %670 = sbr.rel (%p668) target = $region48
      $region47: #{tpu_custom_call.1} parent=5 // pred_region
        %s671 = ssub.s32 %s20, 2
        // Predicated region
        $region49: #{tpu_custom_call.1} parent=47 // pred_check
          %p672 = pneg %p96
        $region50: #{tpu_custom_call.1} parent=47 // pred_check_branch
          %674 = sbr.rel (%p672) target = $region52
        $region51: #{tpu_custom_call.1} parent=47 // pred_region
          %s675 = sand.u32 %s81, 1
          %s676 = scalar_lea.sflag [#allocation4], %s675
          %s677 = sand.u32 %s81, 1
          %s678 = scalar_lea.vmem [#allocation7], %s677
          %679 = dma.done %s676, 16
        $region52: #{tpu_custom_call.1} parent=47 // pred_fallthru
          _
        // Predicated region
        $region53: #{tpu_custom_call.1} parent=47 // pred_check
          %p680 = pneg %p122
        $region54: #{tpu_custom_call.1} parent=47 // pred_check_branch
          %682 = sbr.rel (%p680) target = $region56
        $region55: #{tpu_custom_call.1} parent=47 // pred_region
          %s683 = sand.u32 %s107, 1
          %s684 = scalar_lea.sflag [#allocation9], %s683
          %s685 = sand.u32 %s107, 1
          %s686 = scalar_lea.vmem [#allocation8], %s685
          %687 = dma.done %s684, 16
        $region56: #{tpu_custom_call.1} parent=47 // pred_fallthru
          _
      $region48: #{tpu_custom_call.1} parent=5 // pred_fallthru
        _
    $region6: #{tpu_custom_call.1} parent=1 // loop_footer
      %s24 = sadd.s32 1, %s20
    $region7: #{tpu_custom_call.1} parent=1 // loop_footer_branch
      %19 = sbr.rel target = $region3
    $region8: #{tpu_custom_call.1} parent=1 // loop_exit
      _
    %688 = vsyncpa [#allocation3], 1
    %s689 = scalar_lea.sflag [#allocation3], 1
    %690 = vsyncpa %s689, 1
    %691 = vsyncpa [#allocation6], 1
    %692 = vsyncpa [#allocation4], 1
    %s693 = scalar_lea.sflag [#allocation4], 1
    %694 = vsyncpa %s693, 1
    %695 = vsyncpa [#allocation9], 1
    %s696 = scalar_lea.sflag [#allocation9], 1
    %697 = vsyncpa %s696, 1

</llo_original>
